<compile_context>
chip_gen: v7x
topology: tpu7x:2x2x1
jax: 0.10.0
libtpu: 0.0.40
codegen_flags: <defaults>
</compile_context>

<pallas_src>
import math

import jax
import jax.numpy as jnp
from jax.experimental import pallas as pl
from jax.experimental.pallas import tpu as pltpu

_OUT_LANES = 128  # lane-dense packed output width


def _round_up(x, m):
    return ((x + m - 1) // m) * m


# ---------------------------------------------------------------------------
# Kernel
# ---------------------------------------------------------------------------
def _actor_critic_kernel(state_ref, action_ref, inv_var_ref,
                         w1_ref, b1_ref, w2_ref, b2_ref, w3_ref, b3_ref,
                         out_ref):
    x = state_ref[...]            # (T, D)   float32
    act = action_ref[...]         # (T, A)   float32
    a_dim = act.shape[-1]

    # Fused actor||critic MLP: each layer is one MXU matmul on packed
    # (concat / block-diagonal) weights.
    h = jnp.dot(x, w1_ref[...], preferred_element_type=jnp.float32) + b1_ref[...]
    h = jnp.maximum(h, 0.0)                                        # (T, 2H)
    h = jnp.dot(h, w2_ref[...], preferred_element_type=jnp.float32) + b2_ref[...]
    h = jnp.maximum(h, 0.0)                                        # (T, 2H)
    y = jnp.dot(h, w3_ref[...], preferred_element_type=jnp.float32) + b3_ref[...]
    # y: (T, A+1) -> cols [0:A] = pre-tanh action mean, col A = value

    mean = jnp.tanh(y[:, :a_dim])                                  # (T, A)
    value = y[:, a_dim:a_dim + 1]                                  # (T, 1)

    # Per-row quadratic term of the diagonal-Gaussian log-prob.
    # inv_var = exp(-log_std) is precomputed in the wrapper; the remaining
    # constants (logdet, A*log(2*pi)) are added in the wrapper too.
    diff = act - mean
    quad = jnp.sum(diff * diff * inv_var_ref[...], axis=-1, keepdims=True)  # (T,1)
    neg_half_quad = -0.5 * quad

    # Lane-dense packed output: one unmasked full-tile store.
    #   col 0: -0.5 * quad  (log-prob minus constants)
    #   col 1: value
    lane = jax.lax.broadcasted_iota(jnp.int32, out_ref.shape, 1)
    out_ref[...] = jnp.where(lane == 0, neg_half_quad,
                             jnp.where(lane == 1, value, 0.0))


# ---------------------------------------------------------------------------
# Weight packing (actor + critic fused per layer)
# ---------------------------------------------------------------------------
def _pack_fused_weights(params):
    H = params["aw2"].shape[0]
    A = params["aw3"].shape[1]
    f32 = jnp.float32

    w1 = jnp.concatenate([params["aw1"], params["cw1"]], axis=1)         # (D, 2H)
    b1 = jnp.concatenate([params["ab1"], params["cb1"]], axis=1)         # (1, 2H)

    zhh = jnp.zeros((H, H), f32)
    w2 = jnp.block([[params["aw2"], zhh],
                    [zhh, params["cw2"]]])                               # (2H, 2H)
    b2 = jnp.concatenate([params["ab2"], params["cb2"]], axis=1)         # (1, 2H)

    w3 = jnp.block([[params["aw3"], jnp.zeros((H, 1), f32)],
                    [jnp.zeros((H, A), f32), params["cw3"]]])            # (2H, A+1)
    b3 = jnp.concatenate([params["ab3"], params["cb3"]], axis=1)         # (1, A+1)

    return w1, b1, w2, b2, w3, b3


# ---------------------------------------------------------------------------
# Wrapper
# ---------------------------------------------------------------------------
def evaluate(params, state, action, *, tile_b=512):
    """Pallas equivalent of ActorCriticContinuous.evaluate(state, action).

    Returns (action_log_probs (B,1), value (B,1), dist_entropy (B,)).
    """
    B, D = state.shape
    A = action.shape[1]

    # In production pre-pack once; cheap XLA ops here.
    w1, b1, w2, b2, w3, b3 = _pack_fused_weights(params)
    two_h = w1.shape[1]

    log_std = params["log_std"]                  # (1, A); variance = exp(log_std)
    inv_var = jnp.exp(-log_std)                  # (1, A), hoisted out of the kernel

    tile_b = min(tile_b, _round_up(B, 8))
    grid = (pl.cdiv(B, tile_b),)

    out = pl.pallas_call(
        _actor_critic_kernel,
        out_shape=jax.ShapeDtypeStruct((B, _OUT_LANES), jnp.float32),
        grid=grid,
        in_specs=[
            pl.BlockSpec((tile_b, D), lambda i: (i, 0)),      # state   (streamed)
            pl.BlockSpec((tile_b, A), lambda i: (i, 0)),      # action  (streamed)
            pl.BlockSpec((1, A), lambda i: (0, 0)),           # inv_var (resident)
            pl.BlockSpec((D, two_h), lambda i: (0, 0)),       # w1      (resident)
            pl.BlockSpec((1, two_h), lambda i: (0, 0)),       # b1
            pl.BlockSpec((two_h, two_h), lambda i: (0, 0)),   # w2
            pl.BlockSpec((1, two_h), lambda i: (0, 0)),       # b2
            pl.BlockSpec((two_h, A + 1), lambda i: (0, 0)),   # w3
            pl.BlockSpec((1, A + 1), lambda i: (0, 0)),       # b3
        ],
        out_specs=pl.BlockSpec((tile_b, _OUT_LANES), lambda i: (i, 0)),
        compiler_params=pltpu.CompilerParams(
            dimension_semantics=("parallel",),
        ),
    )(state, action, inv_var, w1, b1, w2, b2, w3, b3)

    # log_std-only constants, computed once outside the kernel.
    log2pi = math.log(2.0 * math.pi)
    logdet = jnp.sum(log_std)
    shift = -0.5 * (logdet + A * log2pi)

    logp = out[:, 0:1] + shift                                   # (B, 1)
    value = out[:, 1:2]                                          # (B, 1)
    ent_scalar = (0.5 * A * (1.0 + log2pi) + 0.5 * logdet).astype(jnp.float32)
    entropy = jnp.broadcast_to(ent_scalar, (B,))                 # (B,)
    return logp, value, entropy


# ---------------------------------------------------------------------------
# Parameter init (mirrors init_weights: W ~ N(0, 0.1), b = 0.1; log_std = std*std)
# ---------------------------------------------------------------------------
def init_params(key, input_size, num_actions, hidden_size, std=0.1,
                w_std=0.1, bias=0.1):
    keys = jax.random.split(key, 6)

    def lin(k, fan_in, fan_out):
        w = jax.random.normal(k, (fan_in, fan_out), dtype=jnp.float32) * w_std
        b = jnp.full((1, fan_out), bias, dtype=jnp.float32)
        return w, b

    aw1, ab1 = lin(keys[0], input_size, hidden_size)
    aw2, ab2 = lin(keys[1], hidden_size, hidden_size)
    aw3, ab3 = lin(keys[2], hidden_size, num_actions)
    cw1, cb1 = lin(keys[3], input_size, hidden_size)
    cw2, cb2 = lin(keys[4], hidden_size, hidden_size)
    cw3, cb3 = lin(keys[5], hidden_size, 1)
    log_std = jnp.full((1, num_actions), std * std, dtype=jnp.float32)
    return dict(
        aw1=aw1, ab1=ab1, aw2=aw2, ab2=ab2, aw3=aw3, ab3=ab3,
        cw1=cw1, cb1=cb1, cw2=cw2, cb2=cb2, cw3=cw3, cb3=cb3,
        log_std=log_std,
    )


# ---------------------------------------------------------------------------
# Pure-JAX reference (unfused) for correctness checking
# ---------------------------------------------------------------------------
def _reference_evaluate(params, state, action):
    def relu(x):
        return jnp.maximum(x, 0.0)

    h = relu(state @ params["aw1"] + params["ab1"])
    h = relu(h @ params["aw2"] + params["ab2"])
    mean = jnp.tanh(h @ params["aw3"] + params["ab3"])

    c = relu(state @ params["cw1"] + params["cb1"])
    c = relu(c @ params["cw2"] + params["cb2"])
    value = c @ params["cw3"] + params["cb3"]

    log_std = params["log_std"]
    var = jnp.exp(log_std)
    diff = action - mean
    a_dim = mean.shape[-1]
    log2pi = math.log(2.0 * math.pi)
    quad = jnp.sum(diff * diff / var, axis=-1, keepdims=True)
    logdet = jnp.sum(log_std)
    logp = -0.5 * (quad + logdet + a_dim * log2pi)
    ent = 0.5 * a_dim * (1.0 + log2pi) + 0.5 * logdet
    ent = jnp.full((state.shape[0],), ent, dtype=jnp.float32)
    return logp, value, ent


if __name__ == "__main__":
    # Small, module-consistent shapes; B=256 with TILE_B=128 exercises the
    # multi-step (pipelined) grid path.
    B, INPUT_SIZE, HIDDEN, NUM_ACTIONS = 256, 32, 32, 4
    TILE_B = 128

    key = jax.random.PRNGKey(0)
    k_params, k_state, k_action = jax.random.split(key, 3)

    params = init_params(k_params, INPUT_SIZE, NUM_ACTIONS, HIDDEN, std=0.1)
    state = jax.random.normal(k_state, (B, INPUT_SIZE), dtype=jnp.float32)
    action = jax.random.normal(k_action, (B, NUM_ACTIONS), dtype=jnp.float32)

    logp, value, entropy = evaluate(params, state, action, tile_b=TILE_B)
    jax.block_until_ready((logp, value, entropy))

    ref_logp, ref_value, ref_ent = _reference_evaluate(params, state, action)
    assert logp.shape == (B, 1) and value.shape == (B, 1) and entropy.shape == (B,)
    assert jnp.allclose(logp, ref_logp, atol=1e-3, rtol=1e-3)
    assert jnp.allclose(value, ref_value, atol=1e-3, rtol=1e-3)
    assert jnp.allclose(entropy, ref_ent, atol=1e-3, rtol=1e-3)

    print("KERNEL_OK")
</pallas_src>

<mosaic_0001>
module attributes {stable_mosaic.version = 11 : i64} {
  func.func @_actor_critic_kernel(%arg0: i32, %arg1: memref<128x32xf32, #tpu.memory_space<vmem>>, %arg2: memref<128x4xf32, #tpu.memory_space<vmem>>, %arg3: memref<1x4xf32, #tpu.memory_space<vmem>>, %arg4: memref<32x64xf32, #tpu.memory_space<vmem>>, %arg5: memref<1x64xf32, #tpu.memory_space<vmem>>, %arg6: memref<64x64xf32, #tpu.memory_space<vmem>>, %arg7: memref<1x64xf32, #tpu.memory_space<vmem>>, %arg8: memref<64x5xf32, #tpu.memory_space<vmem>>, %arg9: memref<1x5xf32, #tpu.memory_space<vmem>>, %arg10: memref<128x128xf32, #tpu.memory_space<vmem>>) attributes {dimension_semantics = [#tpu.dimension_semantics<parallel>], iteration_bounds = array<i64: 2>, scalar_prefetch = 0 : i64, scratch_operands = 0 : i64, tpu.core_type = #tpu.core_type<tc>, window_params = [{transform_indices = @transform_0, window_bounds = array<i64: 128, 32>}, {transform_indices = @transform_1, window_bounds = array<i64: 128, 4>}, {pipeline_mode = #tpu.pipeline_mode<synchronous>, transform_indices = @transform_2, window_bounds = array<i64: 1, 4>}, {pipeline_mode = #tpu.pipeline_mode<synchronous>, transform_indices = @transform_3, window_bounds = array<i64: 32, 64>}, {pipeline_mode = #tpu.pipeline_mode<synchronous>, transform_indices = @transform_4, window_bounds = array<i64: 1, 64>}, {pipeline_mode = #tpu.pipeline_mode<synchronous>, transform_indices = @transform_5, window_bounds = array<i64: 64, 64>}, {pipeline_mode = #tpu.pipeline_mode<synchronous>, transform_indices = @transform_6, window_bounds = array<i64: 1, 64>}, {pipeline_mode = #tpu.pipeline_mode<synchronous>, transform_indices = @transform_7, window_bounds = array<i64: 64, 5>}, {pipeline_mode = #tpu.pipeline_mode<synchronous>, transform_indices = @transform_8, window_bounds = array<i64: 1, 5>}, {transform_indices = @transform_9, window_bounds = array<i64: 128, 128>}]} {
    %c0 = arith.constant 0 : index
    %c0_0 = arith.constant 0 : index
    %0 = vector.load %arg1[%c0, %c0_0] : memref<128x32xf32, #tpu.memory_space<vmem>>, vector<128x32xf32>
    %c0_1 = arith.constant 0 : index
    %c0_2 = arith.constant 0 : index
    %1 = vector.load %arg2[%c0_1, %c0_2] : memref<128x4xf32, #tpu.memory_space<vmem>>, vector<128x4xf32>
    %c0_3 = arith.constant 0 : index
    %c0_4 = arith.constant 0 : index
    %2 = vector.load %arg4[%c0_3, %c0_4] : memref<32x64xf32, #tpu.memory_space<vmem>>, vector<32x64xf32>
    %cst = arith.constant dense<0.000000e+00> : vector<128x64xf32>
    %3 = tpu.matmul %0, %2, %cst {dimension_numbers = #tpu.dot_dimension_numbers<[1], [0], [0], [1], [0, 0, 1, 1], [], []>} : vector<128x32xf32>, vector<32x64xf32>, vector<128x64xf32> -> vector<128x64xf32>
    %c0_5 = arith.constant 0 : index
    %c0_6 = arith.constant 0 : index
    %4 = vector.load %arg5[%c0_5, %c0_6] : memref<1x64xf32, #tpu.memory_space<vmem>>, vector<1x64xf32>
    %5 = vector.broadcast %4 : vector<1x64xf32> to vector<128x64xf32>
    %6 = arith.addf %3, %5 : vector<128x64xf32>
    %cst_7 = arith.constant 0.000000e+00 : f32
    %7 = vector.broadcast %cst_7 : f32 to vector<128x64xf32>
    %8 = arith.maximumf %6, %7 : vector<128x64xf32>
    %c0_8 = arith.constant 0 : index
    %c0_9 = arith.constant 0 : index
    %9 = vector.load %arg6[%c0_8, %c0_9] : memref<64x64xf32, #tpu.memory_space<vmem>>, vector<64x64xf32>
    %cst_10 = arith.constant dense<0.000000e+00> : vector<128x64xf32>
    %10 = tpu.matmul %8, %9, %cst_10 {dimension_numbers = #tpu.dot_dimension_numbers<[1], [0], [0], [1], [0, 0, 1, 1], [], []>} : vector<128x64xf32>, vector<64x64xf32>, vector<128x64xf32> -> vector<128x64xf32>
    %c0_11 = arith.constant 0 : index
    %c0_12 = arith.constant 0 : index
    %11 = vector.load %arg7[%c0_11, %c0_12] : memref<1x64xf32, #tpu.memory_space<vmem>>, vector<1x64xf32>
    %12 = vector.broadcast %11 : vector<1x64xf32> to vector<128x64xf32>
    %13 = arith.addf %10, %12 : vector<128x64xf32>
    %cst_13 = arith.constant 0.000000e+00 : f32
    %14 = vector.broadcast %cst_13 : f32 to vector<128x64xf32>
    %15 = arith.maximumf %13, %14 : vector<128x64xf32>
    %c0_14 = arith.constant 0 : index
    %c0_15 = arith.constant 0 : index
    %16 = vector.load %arg8[%c0_14, %c0_15] : memref<64x5xf32, #tpu.memory_space<vmem>>, vector<64x5xf32>
    %cst_16 = arith.constant dense<0.000000e+00> : vector<128x5xf32>
    %17 = tpu.matmul %15, %16, %cst_16 {dimension_numbers = #tpu.dot_dimension_numbers<[1], [0], [0], [1], [0, 0, 1, 1], [], []>} : vector<128x64xf32>, vector<64x5xf32>, vector<128x5xf32> -> vector<128x5xf32>
    %c0_17 = arith.constant 0 : index
    %c0_18 = arith.constant 0 : index
    %18 = vector.load %arg9[%c0_17, %c0_18] : memref<1x5xf32, #tpu.memory_space<vmem>>, vector<1x5xf32>
    %19 = vector.broadcast %18 : vector<1x5xf32> to vector<128x5xf32>
    %20 = arith.addf %17, %19 : vector<128x5xf32>
    %21 = vector.extract_strided_slice %20 {offsets = [0, 0], sizes = [128, 4], strides = [1, 1]} : vector<128x5xf32> to vector<128x4xf32>
    %22 = math.tanh %21 : vector<128x4xf32>
    %23 = vector.extract_strided_slice %20 {offsets = [0, 4], sizes = [128, 1], strides = [1, 1]} : vector<128x5xf32> to vector<128x1xf32>
    %24 = arith.subf %1, %22 : vector<128x4xf32>
    %25 = arith.mulf %24, %24 : vector<128x4xf32>
    %c0_19 = arith.constant 0 : index
    %c0_20 = arith.constant 0 : index
    %26 = vector.load %arg3[%c0_19, %c0_20] : memref<1x4xf32, #tpu.memory_space<vmem>>, vector<1x4xf32>
    %27 = vector.broadcast %26 : vector<1x4xf32> to vector<128x4xf32>
    %28 = arith.mulf %25, %27 : vector<128x4xf32>
    %cst_21 = arith.constant dense<0.000000e+00> : vector<128xf32>
    %29 = vector.multi_reduction <add>, %28, %cst_21 [1] : vector<128x4xf32> to vector<128xf32>
    %30 = vector.shape_cast %29 : vector<128xf32> to vector<128x1xf32>
    %cst_22 = arith.constant -5.000000e-01 : f32
    %31 = vector.broadcast %cst_22 : f32 to vector<128x1xf32>
    %32 = arith.mulf %31, %30 : vector<128x1xf32>
    %33 = tpu.iota {dimensions = array<i32: 1>} : vector<128x128xi32>
    %c0_i32 = arith.constant 0 : i32
    %34 = vector.broadcast %c0_i32 : i32 to vector<128x128xi32>
    %35 = arith.cmpi eq, %33, %34 : vector<128x128xi32>
    %c1_i32 = arith.constant 1 : i32
    %36 = vector.broadcast %c1_i32 : i32 to vector<128x128xi32>
    %37 = arith.cmpi eq, %33, %36 : vector<128x128xi32>
    %cst_23 = arith.constant 0.000000e+00 : f32
    %38 = vector.shape_cast %23 : vector<128x1xf32> to vector<128x1xf32>
    %39 = vector.broadcast %38 : vector<128x1xf32> to vector<128x128xf32>
    %40 = vector.broadcast %cst_23 : f32 to vector<128x128xf32>
    %41 = arith.select %37, %39, %40 : vector<128x128xi1>, vector<128x128xf32>
    %42 = vector.shape_cast %32 : vector<128x1xf32> to vector<128x1xf32>
    %43 = vector.broadcast %42 : vector<128x1xf32> to vector<128x128xf32>
    %44 = arith.select %35, %43, %41 : vector<128x128xi1>, vector<128x128xf32>
    %c0_24 = arith.constant 0 : index
    %c0_25 = arith.constant 0 : index
    %45 = vector.load %arg10[%c0_24, %c0_25] : memref<128x128xf32, #tpu.memory_space<vmem>>, vector<128x128xf32>
    tpu.vector_store %arg10[%c0_24, %c0_25], %44 {strides = array<i32>} : memref<128x128xf32, #tpu.memory_space<vmem>>, vector<128x128xf32>,
    return
  }
  func.func @transform_0(%arg0: i32) -> (i32, i32) {
    %c0_i32 = arith.constant 0 : i32
    %c0_i32_0 = arith.constant 0 : i32
    return %arg0, %c0_i32 : i32, i32
  }
  func.func @transform_1(%arg0: i32) -> (i32, i32) {
    %c0_i32 = arith.constant 0 : i32
    %c0_i32_0 = arith.constant 0 : i32
    return %arg0, %c0_i32 : i32, i32
  }
  func.func @transform_2(%arg0: i32) -> (i32, i32) {
    %c0_i32 = arith.constant 0 : i32
    %c0_i32_0 = arith.constant 0 : i32
    %c0_i32_1 = arith.constant 0 : i32
    return %c0_i32, %c0_i32_0 : i32, i32
  }
  func.func @transform_3(%arg0: i32) -> (i32, i32) {
    %c0_i32 = arith.constant 0 : i32
    %c0_i32_0 = arith.constant 0 : i32
    %c0_i32_1 = arith.constant 0 : i32
    return %c0_i32, %c0_i32_0 : i32, i32
  }
  func.func @transform_4(%arg0: i32) -> (i32, i32) {
    %c0_i32 = arith.constant 0 : i32
    %c0_i32_0 = arith.constant 0 : i32
    %c0_i32_1 = arith.constant 0 : i32
    return %c0_i32, %c0_i32_0 : i32, i32
  }
  func.func @transform_5(%arg0: i32) -> (i32, i32) {
    %c0_i32 = arith.constant 0 : i32
    %c0_i32_0 = arith.constant 0 : i32
    %c0_i32_1 = arith.constant 0 : i32
    return %c0_i32, %c0_i32_0 : i32, i32
  }
  func.func @transform_6(%arg0: i32) -> (i32, i32) {
    %c0_i32 = arith.constant 0 : i32
    %c0_i32_0 = arith.constant 0 : i32
    %c0_i32_1 = arith.constant 0 : i32
    return %c0_i32, %c0_i32_0 : i32, i32
  }
  func.func @transform_7(%arg0: i32) -> (i32, i32) {
    %c0_i32 = arith.constant 0 : i32
    %c0_i32_0 = arith.constant 0 : i32
    %c0_i32_1 = arith.constant 0 : i32
    return %c0_i32, %c0_i32_0 : i32, i32
  }
  func.func @transform_8(%arg0: i32) -> (i32, i32) {
    %c0_i32 = arith.constant 0 : i32
    %c0_i32_0 = arith.constant 0 : i32
    %c0_i32_1 = arith.constant 0 : i32
    return %c0_i32, %c0_i32_0 : i32, i32
  }
  func.func @transform_9(%arg0: i32) -> (i32, i32) {
    %c0_i32 = arith.constant 0 : i32
    %c0_i32_0 = arith.constant 0 : i32
    return %arg0, %c0_i32 : i32, i32
  }
}

</mosaic_0001>

<llo_original>
// kernel: tpu_custom_call.1
$region0: #{tpu_custom_call.1}
  #allocation0 [shape = 'u32[]', space=smem, size = 0x4, offset = 0x4, fixed_abs, tag = 'smem constant byte address 0x4 - core index']
  #allocation1 [shape = 'u32[144,128]{1,0:T(1,128)}', space=vmem, size = 0x12000, scoped, tag = 'internal scratch']
  %s0 = inlined_call_operand.vmem [shape: f32[256,32], index: 0, kind: input, shape index: {}]
  %s1 = inlined_call_operand.vmem [shape: f32[256,4], index: 1, kind: input, shape index: {}]
  %s2 = inlined_call_operand.vmem [shape: f32[1,4], index: 2, kind: input, shape index: {}]
  %s3 = inlined_call_operand.vmem [shape: f32[32,64], index: 3, kind: input, shape index: {}]
  %s4 = inlined_call_operand.vmem [shape: f32[1,64], index: 4, kind: input, shape index: {}]
  %s5 = inlined_call_operand.vmem [shape: f32[64,64], index: 5, kind: input, shape index: {}]
  %s6 = inlined_call_operand.vmem [shape: f32[1,64], index: 6, kind: input, shape index: {}]
  %s7 = inlined_call_operand.vmem [shape: f32[64,5], index: 7, kind: input, shape index: {}]
  %s8 = inlined_call_operand.vmem [shape: f32[1,5], index: 8, kind: input, shape index: {}]
  %s9 = inlined_call_operand.hbm [shape: f32[256,128], index: 9, kind: output, shape index: {}]
  %s10 = sld [smem:[#allocation0]]
  $region69: #{tpu_custom_call.1} parent=0
    _
  %s12 = ssub.s32 1, %s10
  %s13 = scalar_select 0, %s12, %s10
  $region1: #{tpu_custom_call.1} parent=0
    #allocation2 [shape = 'u8[131072]{0}', space=vmem, size = 0x20000, scoped, tag = 'output window, operand 0']
    #allocation3 [shape = 's32[2]{0}', space=sflag, size = 0x8, scoped, tag = 'scoped memory for tpu_custom_call.1']
    %14 = vsyncpa [#allocation3], 0
    %s15 = scalar_lea.sflag [#allocation3], 1
    %16 = vsyncpa %s15, 0
    loop: start=0, step=1, limit=4
    $region2: #{tpu_custom_call.1} parent=1 // loop_pre_header
      _
    $region3: #{tpu_custom_call.1} parent=1 // loop_header
      %s18 = sphi 0, %s22
      %p19 = scmp.ge.s32.totalorder %s18, 4
      %s28 = sphi 0, %s30
      %s31 = sphi 0, %s28
      %s32 = sphi 0, %s31
      %s48 = sphi 0, %s32
      %s54 = sphi 0, %s56
      %s57 = sphi 0, %s54
      %s58 = sphi 0, %s57
      %s74 = sphi 0, %s58
      %s78 = sphi 0, %s78
      %s80 = sphi 0, %s78
      %s81 = sphi 0, %s80
      %s95 = sphi 0, %s81
      %s99 = sphi 0, %s99
      %s101 = sphi 0, %s99
      %s102 = sphi 0, %s101
      %s116 = sphi 0, %s102
      %s120 = sphi 0, %s120
      %s122 = sphi 0, %s120
      %s123 = sphi 0, %s122
      %s137 = sphi 0, %s123
      %s141 = sphi 0, %s141
      %s143 = sphi 0, %s141
      %s144 = sphi 0, %s143
      %s158 = sphi 0, %s144
      %s162 = sphi 0, %s162
      %s164 = sphi 0, %s162
      %s165 = sphi 0, %s164
      %s179 = sphi 0, %s165
      %s183 = sphi 0, %s183
      %s185 = sphi 0, %s183
      %s186 = sphi 0, %s185
      %s200 = sphi 0, %s186
      %s204 = sphi 0, %s204
      %s206 = sphi 0, %s204
      %s207 = sphi 0, %s206
      %s221 = sphi 0, %s207
      %s227 = sphi 0, %s229
      %s230 = sphi 0, %s227
      %s231 = sphi 0, %s230
      %s247 = sphi 0, %s231
    $region4: #{tpu_custom_call.1} parent=1 // loop_header_branch
      %21 = sbr.rel (%p19) target = $region8
    $region5: #{tpu_custom_call.1} parent=1 // loop_body
      %s23 = ssub.s32 %s18, 1
      %s24 = ssub.s32 %s18, 2
      %s25 = sadd.s32 %s18, 1
      %s26 = ssub.s32 %s18, %s25
      %p27 = scmp.eq.s32.totalorder %s26, 0
      %s29 = sadd.s32 %s28, 1
      %s30 = scalar_select %p27, %s28, %s29
      %p33 = pneg %p27
      %p34 = scmp.eq.s32.totalorder %s18, 1
      %p35 = por %p33, %p34
      %p36 = scmp.ne.s32.totalorder %s28, %s31
      %p37 = scmp.eq.s32.totalorder %s18, 0
      %p38 = por %p36, %p37
      %p39 = scmp.ne.s32.totalorder %s28, %s31
      %p40 = scmp.eq.s32.totalorder %s23, 1
      %p41 = por %p39, %p40
      %p42 = scmp.ne.s32.totalorder %s31, %s32
      %p43 = scmp.eq.s32.totalorder %s23, 0
      %p44 = por %p42, %p43
      %p45 = scmp.ne.s32.totalorder %s31, %s32
      %p46 = scmp.eq.s32.totalorder %s24, 1
      %p47 = por %p45, %p46
      %p49 = scmp.ne.s32.totalorder %s32, %s48
      %p50 = scmp.eq.s32.totalorder %s24, 0
      %p51 = por %p49, %p50
      %s52 = ssub.s32 %s18, %s25
      %p53 = scmp.eq.s32.totalorder %s52, 0
      %s55 = sadd.s32 %s54, 1
      %s56 = scalar_select %p53, %s54, %s55
      %p59 = pneg %p53
      %p60 = scmp.eq.s32.totalorder %s18, 1
      %p61 = por %p59, %p60
      %p62 = scmp.ne.s32.totalorder %s54, %s57
      %p63 = scmp.eq.s32.totalorder %s18, 0
      %p64 = por %p62, %p63
      %p65 = scmp.ne.s32.totalorder %s54, %s57
      %p66 = scmp.eq.s32.totalorder %s23, 1
      %p67 = por %p65, %p66
      %p68 = scmp.ne.s32.totalorder %s57, %s58
      %p69 = scmp.eq.s32.totalorder %s23, 0
      %p70 = por %p68, %p69
      %p71 = scmp.ne.s32.totalorder %s57, %s58
      %p72 = scmp.eq.s32.totalorder %s24, 1
      %p73 = por %p71, %p72
      %p75 = scmp.ne.s32.totalorder %s58, %s74
      %p76 = scmp.eq.s32.totalorder %s24, 0
      %p77 = por %p75, %p76
      %s79 = sadd.s32 %s78, 1
      %p82 = scmp.eq.s32.totalorder %s18, 1
      %p83 = scmp.ne.s32.totalorder %s78, %s80
      %p84 = scmp.eq.s32.totalorder %s18, 0
      %p85 = por %p83, %p84
      %p86 = scmp.ne.s32.totalorder %s78, %s80
      %p87 = scmp.eq.s32.totalorder %s23, 1
      %p88 = por %p86, %p87
      %p89 = scmp.ne.s32.totalorder %s80, %s81
      %p90 = scmp.eq.s32.totalorder %s23, 0
      %p91 = por %p89, %p90
      %p92 = scmp.ne.s32.totalorder %s80, %s81
      %p93 = scmp.eq.s32.totalorder %s24, 1
      %p94 = por %p92, %p93
      %p96 = scmp.ne.s32.totalorder %s81, %s95
      %p97 = scmp.eq.s32.totalorder %s24, 0
      %p98 = por %p96, %p97
      %s100 = sadd.s32 %s99, 1
      %p103 = scmp.eq.s32.totalorder %s18, 1
      %p104 = scmp.ne.s32.totalorder %s99, %s101
      %p105 = scmp.eq.s32.totalorder %s18, 0
      %p106 = por %p104, %p105
      %p107 = scmp.ne.s32.totalorder %s99, %s101
      %p108 = scmp.eq.s32.totalorder %s23, 1
      %p109 = por %p107, %p108
      %p110 = scmp.ne.s32.totalorder %s101, %s102
      %p111 = scmp.eq.s32.totalorder %s23, 0
      %p112 = por %p110, %p111
      %p113 = scmp.ne.s32.totalorder %s101, %s102
      %p114 = scmp.eq.s32.totalorder %s24, 1
      %p115 = por %p113, %p114
      %p117 = scmp.ne.s32.totalorder %s102, %s116
      %p118 = scmp.eq.s32.totalorder %s24, 0
      %p119 = por %p117, %p118
      %s121 = sadd.s32 %s120, 1
      %p124 = scmp.eq.s32.totalorder %s18, 1
      %p125 = scmp.ne.s32.totalorder %s120, %s122
      %p126 = scmp.eq.s32.totalorder %s18, 0
      %p127 = por %p125, %p126
      %p128 = scmp.ne.s32.totalorder %s120, %s122
      %p129 = scmp.eq.s32.totalorder %s23, 1
      %p130 = por %p128, %p129
      %p131 = scmp.ne.s32.totalorder %s122, %s123
      %p132 = scmp.eq.s32.totalorder %s23, 0
      %p133 = por %p131, %p132
      %p134 = scmp.ne.s32.totalorder %s122, %s123
      %p135 = scmp.eq.s32.totalorder %s24, 1
      %p136 = por %p134, %p135
      %p138 = scmp.ne.s32.totalorder %s123, %s137
      %p139 = scmp.eq.s32.totalorder %s24, 0
      %p140 = por %p138, %p139
      %s142 = sadd.s32 %s141, 1
      %p145 = scmp.eq.s32.totalorder %s18, 1
      %p146 = scmp.ne.s32.totalorder %s141, %s143
      %p147 = scmp.eq.s32.totalorder %s18, 0
      %p148 = por %p146, %p147
      %p149 = scmp.ne.s32.totalorder %s141, %s143
      %p150 = scmp.eq.s32.totalorder %s23, 1
      %p151 = por %p149, %p150
      %p152 = scmp.ne.s32.totalorder %s143, %s144
      %p153 = scmp.eq.s32.totalorder %s23, 0
      %p154 = por %p152, %p153
      %p155 = scmp.ne.s32.totalorder %s143, %s144
      %p156 = scmp.eq.s32.totalorder %s24, 1
      %p157 = por %p155, %p156
      %p159 = scmp.ne.s32.totalorder %s144, %s158
      %p160 = scmp.eq.s32.totalorder %s24, 0
      %p161 = por %p159, %p160
      %s163 = sadd.s32 %s162, 1
      %p166 = scmp.eq.s32.totalorder %s18, 1
      %p167 = scmp.ne.s32.totalorder %s162, %s164
      %p168 = scmp.eq.s32.totalorder %s18, 0
      %p169 = por %p167, %p168
      %p170 = scmp.ne.s32.totalorder %s162, %s164
      %p171 = scmp.eq.s32.totalorder %s23, 1
      %p172 = por %p170, %p171
      %p173 = scmp.ne.s32.totalorder %s164, %s165
      %p174 = scmp.eq.s32.totalorder %s23, 0
      %p175 = por %p173, %p174
      %p176 = scmp.ne.s32.totalorder %s164, %s165
      %p177 = scmp.eq.s32.totalorder %s24, 1
      %p178 = por %p176, %p177
      %p180 = scmp.ne.s32.totalorder %s165, %s179
      %p181 = scmp.eq.s32.totalorder %s24, 0
      %p182 = por %p180, %p181
      %s184 = sadd.s32 %s183, 1
      %p187 = scmp.eq.s32.totalorder %s18, 1
      %p188 = scmp.ne.s32.totalorder %s183, %s185
      %p189 = scmp.eq.s32.totalorder %s18, 0
      %p190 = por %p188, %p189
      %p191 = scmp.ne.s32.totalorder %s183, %s185
      %p192 = scmp.eq.s32.totalorder %s23, 1
      %p193 = por %p191, %p192
      %p194 = scmp.ne.s32.totalorder %s185, %s186
      %p195 = scmp.eq.s32.totalorder %s23, 0
      %p196 = por %p194, %p195
      %p197 = scmp.ne.s32.totalorder %s185, %s186
      %p198 = scmp.eq.s32.totalorder %s24, 1
      %p199 = por %p197, %p198
      %p201 = scmp.ne.s32.totalorder %s186, %s200
      %p202 = scmp.eq.s32.totalorder %s24, 0
      %p203 = por %p201, %p202
      %s205 = sadd.s32 %s204, 1
      %p208 = scmp.eq.s32.totalorder %s18, 1
      %p209 = scmp.ne.s32.totalorder %s204, %s206
      %p210 = scmp.eq.s32.totalorder %s18, 0
      %p211 = por %p209, %p210
      %p212 = scmp.ne.s32.totalorder %s204, %s206
      %p213 = scmp.eq.s32.totalorder %s23, 1
      %p214 = por %p212, %p213
      %p215 = scmp.ne.s32.totalorder %s206, %s207
      %p216 = scmp.eq.s32.totalorder %s23, 0
      %p217 = por %p215, %p216
      %p218 = scmp.ne.s32.totalorder %s206, %s207
      %p219 = scmp.eq.s32.totalorder %s24, 1
      %p220 = por %p218, %p219
      %p222 = scmp.ne.s32.totalorder %s207, %s221
      %p223 = scmp.eq.s32.totalorder %s24, 0
      %p224 = por %p222, %p223
      %s225 = ssub.s32 %s18, %s25
      %p226 = scmp.eq.s32.totalorder %s225, 0
      %s228 = sadd.s32 %s227, 1
      %s229 = scalar_select %p226, %s227, %s228
      %p232 = pneg %p226
      %p233 = scmp.eq.s32.totalorder %s18, 1
      %p234 = por %p232, %p233
      %p235 = scmp.ne.s32.totalorder %s227, %s230
      %p236 = scmp.eq.s32.totalorder %s18, 0
      %p237 = por %p235, %p236
      %p238 = scmp.ne.s32.totalorder %s227, %s230
      %p239 = scmp.eq.s32.totalorder %s23, 1
      %p240 = por %p238, %p239
      %p241 = scmp.ne.s32.totalorder %s230, %s231
      %p242 = scmp.eq.s32.totalorder %s23, 0
      %p243 = por %p241, %p242
      %p244 = scmp.ne.s32.totalorder %s230, %s231
      %p245 = scmp.eq.s32.totalorder %s24, 1
      %p246 = por %p244, %p245
      %p248 = scmp.ne.s32.totalorder %s231, %s247
      %p249 = scmp.eq.s32.totalorder %s24, 0
      %p250 = por %p248, %p249
      %p251 = scmp.le.s32.totalorder 1, %s18
      %p252 = scmp.lt.s32.totalorder %s18, 3
      %p253 = pnand %p251, %p252
      %p254 = pneg %p253
      // Predicated region
      $region9: #{tpu_custom_call.1} parent=5 // pred_check
        _
      $region10: #{tpu_custom_call.1} parent=5 // pred_check_branch
        %256 = sbr.rel (%p253) target = $region12
      $region11: #{tpu_custom_call.1} parent=5 // pred_region
        %s257 = ssub.s32 %s18, 1
        // Predicated region
        $region13: #{tpu_custom_call.1} parent=11 // pred_check
          %p258 = pneg %p91
        $region14: #{tpu_custom_call.1} parent=11 // pred_check_branch
          %260 = sbr.rel (%p258) target = $region16
        $region15: #{tpu_custom_call.1} parent=11 // pred_region
          _
        $region16: #{tpu_custom_call.1} parent=11 // pred_fallthru
          _
        // Predicated region
        $region17: #{tpu_custom_call.1} parent=11 // pred_check
          %p261 = pneg %p112
        $region18: #{tpu_custom_call.1} parent=11 // pred_check_branch
          %263 = sbr.rel (%p261) target = $region20
        $region19: #{tpu_custom_call.1} parent=11 // pred_region
          _
        $region20: #{tpu_custom_call.1} parent=11 // pred_fallthru
          _
        // Predicated region
        $region21: #{tpu_custom_call.1} parent=11 // pred_check
          %p264 = pneg %p133
        $region22: #{tpu_custom_call.1} parent=11 // pred_check_branch
          %266 = sbr.rel (%p264) target = $region24
        $region23: #{tpu_custom_call.1} parent=11 // pred_region
          _
        $region24: #{tpu_custom_call.1} parent=11 // pred_fallthru
          _
        // Predicated region
        $region25: #{tpu_custom_call.1} parent=11 // pred_check
          %p267 = pneg %p154
        $region26: #{tpu_custom_call.1} parent=11 // pred_check_branch
          %269 = sbr.rel (%p267) target = $region28
        $region27: #{tpu_custom_call.1} parent=11 // pred_region
          _
        $region28: #{tpu_custom_call.1} parent=11 // pred_fallthru
          _
        // Predicated region
        $region29: #{tpu_custom_call.1} parent=11 // pred_check
          %p270 = pneg %p175
        $region30: #{tpu_custom_call.1} parent=11 // pred_check_branch
          %272 = sbr.rel (%p270) target = $region32
        $region31: #{tpu_custom_call.1} parent=11 // pred_region
          _
        $region32: #{tpu_custom_call.1} parent=11 // pred_fallthru
          _
        // Predicated region
        $region33: #{tpu_custom_call.1} parent=11 // pred_check
          %p273 = pneg %p196
        $region34: #{tpu_custom_call.1} parent=11 // pred_check_branch
          %275 = sbr.rel (%p273) target = $region36
        $region35: #{tpu_custom_call.1} parent=11 // pred_region
          _
        $region36: #{tpu_custom_call.1} parent=11 // pred_fallthru
          _
        // Predicated region
        $region37: #{tpu_custom_call.1} parent=11 // pred_check
          %p276 = pneg %p217
        $region38: #{tpu_custom_call.1} parent=11 // pred_check_branch
          %278 = sbr.rel (%p276) target = $region40
        $region39: #{tpu_custom_call.1} parent=11 // pred_region
          _
        $region40: #{tpu_custom_call.1} parent=11 // pred_fallthru
          _
      $region12: #{tpu_custom_call.1} parent=5 // pred_fallthru
        _
      %p279 = scmp.lt.s32.totalorder %s18, 2
      // Predicated region
      $region41: #{tpu_custom_call.1} parent=5 // pred_check
        %p280 = pneg %p279
      $region42: #{tpu_custom_call.1} parent=5 // pred_check_branch
        %282 = sbr.rel (%p280) target = $region44
      $region43: #{tpu_custom_call.1} parent=5 // pred_region
        // Predicated region
        $region45: #{tpu_custom_call.1} parent=43 // pred_check
          %p283 = pneg %p38
        $region46: #{tpu_custom_call.1} parent=43 // pred_check_branch
          %285 = sbr.rel (%p283) target = $region48
        $region47: #{tpu_custom_call.1} parent=43 // pred_region
          %s286 = smul.u32 16, %s18
          %p287 = scmp.lt.s32.totalorder %s286, 31
          %s288 = scalar_select %p287, %s286, 31
          %s289 = smul.addr %s288, 8
          %s290 = scalar_lea.vmem %s0, %s289
          %s291 = smul.u32 16, %s18
        $region48: #{tpu_custom_call.1} parent=43 // pred_fallthru
          _
        // Predicated region
        $region49: #{tpu_custom_call.1} parent=43 // pred_check
          %p292 = pneg %p64
        $region50: #{tpu_custom_call.1} parent=43 // pred_check_branch
          %294 = sbr.rel (%p292) target = $region52
        $region51: #{tpu_custom_call.1} parent=43 // pred_region
          %s295 = smul.u32 16, %s18
          %p296 = scmp.lt.s32.totalorder %s295, 31
          %s297 = scalar_select %p296, %s295, 31
          %s298 = smul.addr %s297, 8
          %s299 = scalar_lea.vmem %s1, %s298
          %s300 = smul.u32 16, %s18
        $region52: #{tpu_custom_call.1} parent=43 // pred_fallthru
          _
      $region44: #{tpu_custom_call.1} parent=5 // pred_fallthru
        _
      %p301 = scmp.le.s32.totalorder 1, %s18
      %p302 = scmp.lt.s32.totalorder %s18, 3
      %p303 = pnand %p301, %p302
      %p304 = pneg %p303
      // Predicated region
      $region53: #{tpu_custom_call.1} parent=5 // pred_check
        _
      $region54: #{tpu_custom_call.1} parent=5 // pred_check_branch
        %306 = sbr.rel (%p303) target = $region56
      $region55: #{tpu_custom_call.1} parent=5 // pred_region
        %s307 = ssub.s32 %s18, 1
        %s308 = smul.u32 16, %s23
        %p309 = scmp.lt.s32.totalorder %s308, 31
        %s310 = scalar_select %p309, %s308, 31
        %s311 = smul.addr %s310, 8
        %s312 = scalar_lea.vmem %s0, %s311
        %p313 = pneg %p44
        %p314 = pneg %p41
        %s315 = smul.u32 16, %s23
        %p316 = scmp.lt.s32.totalorder %s315, 31
        %s317 = scalar_select %p316, %s315, 31
        %s318 = smul.addr %s317, 8
        %s319 = scalar_lea.vmem %s1, %s318
        %p320 = pneg %p70
        %p321 = pneg %p67
        %p322 = pneg %p91
        %p323 = pneg %p88
        %p324 = pneg %p112
        %p325 = pneg %p109
        %p326 = pneg %p133
        %p327 = pneg %p130
        %p328 = pneg %p154
        %p329 = pneg %p151
        %p330 = pneg %p175
        %p331 = pneg %p172
        %p332 = pneg %p196
        %p333 = pneg %p193
        %p334 = pneg %p217
        %p335 = pneg %p214
        %p336 = pneg %p243
        %p337 = pneg %p240
        %s338 = sand.u32 %s230, 1
        %s339 = scalar_lea.sflag [#allocation3], %s338
        %s340 = sand.u32 %s230, 1
        %s341 = smul.addr %s340, 128
        %s342 = scalar_lea.vmem [#allocation2], %s341
        %s343 = smul.u32 16, %s23
        %p344 = scmp.lt.s32.totalorder %s343, 31
        %s345 = scalar_select %p344, %s343, 31
        %s346 = smul.addr %s345, 8
        %s347 = scalar_lea.vmem %s0, %s346
        %s348 = smul.u32 16, %s23
        %s349 = smul.u32 16, %s23
        %p350 = scmp.lt.s32.totalorder %s349, 31
        %s351 = scalar_select %p350, %s349, 31
        %s352 = smul.addr %s351, 8
        %s353 = scalar_lea.vmem %s1, %s352
        %s354 = smul.u32 16, %s23
        %s355 = smul.u32 16, %s23
        %v356 = vld [vmem:[%s347] sm:$0xff]
        %v357 = vld [vmem:[%s347 + $0x8] sm:$0xff]
        %v358 = vld [vmem:[%s347 + $0x10] sm:$0xff]
        %v359 = vld [vmem:[%s347 + $0x18] sm:$0xff]
        %v360 = vld [vmem:[%s347 + $0x20] sm:$0xff]
        %v361 = vld [vmem:[%s347 + $0x28] sm:$0xff]
        %v362 = vld [vmem:[%s347 + $0x30] sm:$0xff]
        %v363 = vld [vmem:[%s347 + $0x38] sm:$0xff]
        %v364 = vld [vmem:[%s347 + $0x40] sm:$0xff]
        %v365 = vld [vmem:[%s347 + $0x48] sm:$0xff]
        %v366 = vld [vmem:[%s347 + $0x50] sm:$0xff]
        %v367 = vld [vmem:[%s347 + $0x58] sm:$0xff]
        %v368 = vld [vmem:[%s347 + $0x60] sm:$0xff]
        %v369 = vld [vmem:[%s347 + $0x68] sm:$0xff]
        %v370 = vld [vmem:[%s347 + $0x70] sm:$0xff]
        %v371 = vld [vmem:[%s347 + $0x78] sm:$0xff]
        %v372 = vld [vmem:[%s353] sm:$0xff]
        %v373 = vld [vmem:[%s353 + $0x8] sm:$0xff]
        %v374 = vld [vmem:[%s353 + $0x10] sm:$0xff]
        %v375 = vld [vmem:[%s353 + $0x18] sm:$0xff]
        %v376 = vld [vmem:[%s353 + $0x20] sm:$0xff]
        %v377 = vld [vmem:[%s353 + $0x28] sm:$0xff]
        %v378 = vld [vmem:[%s353 + $0x30] sm:$0xff]
        %v379 = vld [vmem:[%s353 + $0x38] sm:$0xff]
        %v380 = vld [vmem:[%s353 + $0x40] sm:$0xff]
        %v381 = vld [vmem:[%s353 + $0x48] sm:$0xff]
        %v382 = vld [vmem:[%s353 + $0x50] sm:$0xff]
        %v383 = vld [vmem:[%s353 + $0x58] sm:$0xff]
        %v384 = vld [vmem:[%s353 + $0x60] sm:$0xff]
        %v385 = vld [vmem:[%s353 + $0x68] sm:$0xff]
        %v386 = vld [vmem:[%s353 + $0x70] sm:$0xff]
        %v387 = vld [vmem:[%s353 + $0x78] sm:$0xff]
        %v388 = vld [vmem:[%s3] sm:$0xff]
        %v389 = vld [vmem:[%s3 + $0x8] sm:$0xff]
        %v390 = vld [vmem:[%s3 + $0x10] sm:$0xff]
        %v391 = vld [vmem:[%s3 + $0x18] sm:$0xff]
        %v392 = vld [vmem:[%s4] sm:$0x1]
        %v394 = vlaneseq
        %v395 = vshrl.u32 %v394, 7
        %v396 = vsub.s32 0, %v395
        %v397 = vrot.slane %v392, %v396
        %vm399 = vcmask 261120
        %v401 = vsel %vm399, %v356, 0
        %v404 = vsel %vm399, %v357, 0
        %v407 = vsel %vm399, %v358, 0
        %v410 = vsel %vm399, %v359, 0
        %v413 = vsel %vm399, %v360, 0
        %v416 = vsel %vm399, %v361, 0
        %v419 = vsel %vm399, %v362, 0
        %v422 = vsel %vm399, %v363, 0
        %v425 = vsel %vm399, %v364, 0
        %v428 = vsel %vm399, %v365, 0
        %v431 = vsel %vm399, %v366, 0
        %v434 = vsel %vm399, %v367, 0
        %v437 = vsel %vm399, %v368, 0
        %v440 = vsel %vm399, %v369, 0
        %v443 = vsel %vm399, %v370, 0
        %v446 = vsel %vm399, %v371, 0
        %448 = vmatprep.subr.mxu0 0.0
        %449 = vmatpush1.msra.mxu0 %v388
        %450 = vmatprep.subr.mxu0 0.0
        %451 = vmatpush1.msra.mxu0 %v389
        %452 = vmatprep.subr.mxu0 0.0
        %453 = vmatpush1.msra.mxu0 %v390
        %454 = vmatprep.subr.mxu0 0.0
        %455 = vmatpush1.msra.mxu0 %v391
        %456 = vmatprep.subr.mxu0 0.0
        %457 = vmatpush1.msra.mxu0 0.0
        %458 = vmatprep.subr.mxu0 0.0
        %459 = vmatpush1.msra.mxu0 0.0
        %460 = vmatprep.subr.mxu0 0.0
        %461 = vmatpush1.msra.mxu0 0.0
        %462 = vmatprep.subr.mxu0 0.0
        %463 = vmatpush1.msra.mxu0 0.0
        %464 = vmatprep.subr.mxu0 0.0
        %465 = vmatpush1.msra.mxu0 0.0
        %466 = vmatprep.subr.mxu0 0.0
        %467 = vmatpush1.msra.mxu0 0.0
        %468 = vmatprep.subr.mxu0 0.0
        %469 = vmatpush1.msra.mxu0 0.0
        %470 = vmatprep.subr.mxu0 0.0
        %471 = vmatpush1.msra.mxu0 0.0
        %472 = vmatprep.subr.mxu0 0.0
        %473 = vmatpush1.msra.mxu0 0.0
        %474 = vmatprep.subr.mxu0 0.0
        %475 = vmatpush1.msra.mxu0 0.0
        %476 = vmatprep.subr.mxu0 0.0
        %477 = vmatpush1.msra.mxu0 0.0
        %478 = vmatprep.subr.mxu0 0.0
        %479 = vmatpush1.msra.mxu0 0.0
        %480 = vmatprep.subr.mxu0 0.0
        %481 = vmatpush1.msra.mxu0 0.0
        %482 = vmatprep.subr.mxu0 0.0
        %483 = vmatpush1.msra.mxu0 0.0
        %484 = vmatprep.subr.mxu0 0.0
        %485 = vmatpush1.msra.mxu0 0.0
        %486 = vmatprep.subr.mxu0 0.0
        %487 = vmatpush1.msra.mxu0 0.0
        %488 = vmatprep.subr.mxu0 0.0
        %489 = vmatpush1.msra.mxu0 0.0
        %490 = vmatprep.subr.mxu0 0.0
        %491 = vmatpush1.msra.mxu0 0.0
        %492 = vmatprep.subr.mxu0 0.0
        %493 = vmatpush1.msra.mxu0 0.0
        %494 = vmatprep.subr.mxu0 0.0
        %495 = vmatpush1.msra.mxu0 0.0
        %496 = vmatprep.subr.mxu0 0.0
        %497 = vmatpush1.msra.mxu0 0.0
        %498 = vmatprep.subr.mxu0 0.0
        %499 = vmatpush1.msra.mxu0 0.0
        %500 = vmatprep.subr.mxu0 0.0
        %501 = vmatpush1.msra.mxu0 0.0
        %502 = vmatprep.subr.mxu0 0.0
        %503 = vmatpush1.msra.mxu0 0.0
        %504 = vmatprep.subr.mxu0 0.0
        %505 = vmatpush1.msra.mxu0 0.0
        %506 = vmatprep.subr.mxu0 0.0
        %507 = vmatpush1.msra.mxu0 0.0
        %508 = vmatprep.subr.mxu0 0.0
        %509 = vmatpush1.msra.mxu0 0.0
        %510 = vmatprep.subr.mxu0 0.0
        %511 = vmatpush1.msra.mxu0 0.0
        %512 = vmatprep.mubr.f32.mxu0 0.0
        %513 = vmatmul.mubr.f32.gmra.mrb[0].mxu0 %v401
        %v514 = vpop.f32.mrb[0].mxu0
        %v515 = vadd.f32 %v397, %v514
        %v516 = vpop.f32.mrb[0].mxu0
        %517 = vmatprep.mubr.f32.mxu0 0.0
        %518 = vmatmul.mubr.f32.gmra.mrb[0].mxu0 %v404
        %v519 = vpop.f32.mrb[0].mxu0
        %v520 = vadd.f32 %v397, %v519
        %v521 = vpop.f32.mrb[0].mxu0
        %522 = vmatprep.mubr.f32.mxu0 0.0
        %523 = vmatmul.mubr.f32.gmra.mrb[0].mxu0 %v407
        %v524 = vpop.f32.mrb[0].mxu0
        %v525 = vadd.f32 %v397, %v524
        %v526 = vpop.f32.mrb[0].mxu0
        %527 = vmatprep.mubr.f32.mxu0 0.0
        %528 = vmatmul.mubr.f32.gmra.mrb[0].mxu0 %v410
        %v529 = vpop.f32.mrb[0].mxu0
        %v530 = vadd.f32 %v397, %v529
        %v531 = vpop.f32.mrb[0].mxu0
        %532 = vmatprep.mubr.f32.mxu0 0.0
        %533 = vmatmul.mubr.f32.gmra.mrb[0].mxu0 %v413
        %v534 = vpop.f32.mrb[0].mxu0
        %v535 = vadd.f32 %v397, %v534
        %v536 = vpop.f32.mrb[0].mxu0
        %537 = vmatprep.mubr.f32.mxu0 0.0
        %538 = vmatmul.mubr.f32.gmra.mrb[0].mxu0 %v416
        %v539 = vpop.f32.mrb[0].mxu0
        %v540 = vadd.f32 %v397, %v539
        %v541 = vpop.f32.mrb[0].mxu0
        %542 = vmatprep.mubr.f32.mxu0 0.0
        %543 = vmatmul.mubr.f32.gmra.mrb[0].mxu0 %v419
        %v544 = vpop.f32.mrb[0].mxu0
        %v545 = vadd.f32 %v397, %v544
        %v546 = vpop.f32.mrb[0].mxu0
        %547 = vmatprep.mubr.f32.mxu0 0.0
        %548 = vmatmul.mubr.f32.gmra.mrb[0].mxu0 %v422
        %v549 = vpop.f32.mrb[0].mxu0
        %v550 = vadd.f32 %v397, %v549
        %v551 = vpop.f32.mrb[0].mxu0
        %552 = vmatprep.mubr.f32.mxu0 0.0
        %553 = vmatmul.mubr.f32.gmra.mrb[0].mxu0 %v425
        %v554 = vpop.f32.mrb[0].mxu0
        %v555 = vadd.f32 %v397, %v554
        %v556 = vpop.f32.mrb[0].mxu0
        %557 = vmatprep.mubr.f32.mxu0 0.0
        %558 = vmatmul.mubr.f32.gmra.mrb[0].mxu0 %v428
        %v559 = vpop.f32.mrb[0].mxu0
        %v560 = vadd.f32 %v397, %v559
        %v561 = vpop.f32.mrb[0].mxu0
        %562 = vmatprep.mubr.f32.mxu0 0.0
        %563 = vmatmul.mubr.f32.gmra.mrb[0].mxu0 %v431
        %v564 = vpop.f32.mrb[0].mxu0
        %v565 = vadd.f32 %v397, %v564
        %v566 = vpop.f32.mrb[0].mxu0
        %567 = vmatprep.mubr.f32.mxu0 0.0
        %568 = vmatmul.mubr.f32.gmra.mrb[0].mxu0 %v434
        %v569 = vpop.f32.mrb[0].mxu0
        %v570 = vadd.f32 %v397, %v569
        %v571 = vpop.f32.mrb[0].mxu0
        %572 = vmatprep.mubr.f32.mxu0 0.0
        %573 = vmatmul.mubr.f32.gmra.mrb[0].mxu0 %v437
        %v574 = vpop.f32.mrb[0].mxu0
        %v575 = vadd.f32 %v397, %v574
        %v576 = vpop.f32.mrb[0].mxu0
        %577 = vmatprep.mubr.f32.mxu0 0.0
        %578 = vmatmul.mubr.f32.gmra.mrb[0].mxu0 %v440
        %v579 = vpop.f32.mrb[0].mxu0
        %v580 = vadd.f32 %v397, %v579
        %v581 = vpop.f32.mrb[0].mxu0
        %582 = vmatprep.mubr.f32.mxu0 0.0
        %583 = vmatmul.mubr.f32.gmra.mrb[0].mxu0 %v443
        %v584 = vpop.f32.mrb[0].mxu0
        %v585 = vadd.f32 %v397, %v584
        %v586 = vpop.f32.mrb[0].mxu0
        %587 = vmatprep.mubr.f32.mxu0 0.0
        %588 = vmatmul.mubr.f32.gmra.mrb[0].mxu0 %v446
        %v589 = vpop.f32.mrb[0].mxu0
        %v590 = vadd.f32 %v397, %v589
        %v591 = vpop.f32.mrb[0].mxu0
        %592 = vdwg.mxu0
        %v593 = vmax.f32 %v515, 0.0
        %v594 = vmax.f32 %v520, 0.0
        %v595 = vmax.f32 %v525, 0.0
        %v596 = vmax.f32 %v530, 0.0
        %v597 = vmax.f32 %v535, 0.0
        %v598 = vmax.f32 %v540, 0.0
        %v599 = vmax.f32 %v545, 0.0
        %v600 = vmax.f32 %v550, 0.0
        %v601 = vmax.f32 %v555, 0.0
        %v602 = vmax.f32 %v560, 0.0
        %v603 = vmax.f32 %v565, 0.0
        %v604 = vmax.f32 %v570, 0.0
        %v605 = vmax.f32 %v575, 0.0
        %v606 = vmax.f32 %v580, 0.0
        %v607 = vmax.f32 %v585, 0.0
        %v608 = vmax.f32 %v590, 0.0
        %v609 = vld [vmem:[%s5] sm:$0xff]
        %v610 = vld [vmem:[%s5 + $0x8] sm:$0xff]
        %v611 = vld [vmem:[%s5 + $0x10] sm:$0xff]
        %v612 = vld [vmem:[%s5 + $0x18] sm:$0xff]
        %v613 = vld [vmem:[%s5 + $0x20] sm:$0xff]
        %v614 = vld [vmem:[%s5 + $0x28] sm:$0xff]
        %v615 = vld [vmem:[%s5 + $0x30] sm:$0xff]
        %v616 = vld [vmem:[%s5 + $0x38] sm:$0xff]
        %v617 = vld [vmem:[%s6] sm:$0x1]
        %v619 = vlaneseq
        %v620 = vshrl.u32 %v619, 7
        %v621 = vsub.s32 0, %v620
        %v622 = vrot.slane %v617, %v621
        %vm624 = vcmask 523264
        %v626 = vsel %vm624, %v593, 0
        %v629 = vsel %vm624, %v594, 0
        %v632 = vsel %vm624, %v595, 0
        %v635 = vsel %vm624, %v596, 0
        %v638 = vsel %vm624, %v597, 0
        %v641 = vsel %vm624, %v598, 0
        %v644 = vsel %vm624, %v599, 0
        %v647 = vsel %vm624, %v600, 0
        %v650 = vsel %vm624, %v601, 0
        %v653 = vsel %vm624, %v602, 0
        %v656 = vsel %vm624, %v603, 0
        %v659 = vsel %vm624, %v604, 0
        %v662 = vsel %vm624, %v605, 0
        %v665 = vsel %vm624, %v606, 0
        %v668 = vsel %vm624, %v607, 0
        %v671 = vsel %vm624, %v608, 0
        %673 = vmatprep.subr.mxu0 0.0
        %674 = vmatpush1.msra.mxu0 %v609
        %675 = vmatprep.subr.mxu0 0.0
        %676 = vmatpush1.msra.mxu0 %v610
        %677 = vmatprep.subr.mxu0 0.0
        %678 = vmatpush1.msra.mxu0 %v611
        %679 = vmatprep.subr.mxu0 0.0
        %680 = vmatpush1.msra.mxu0 %v612
        %681 = vmatprep.subr.mxu0 0.0
        %682 = vmatpush1.msra.mxu0 %v613
        %683 = vmatprep.subr.mxu0 0.0
        %684 = vmatpush1.msra.mxu0 %v614
        %685 = vmatprep.subr.mxu0 0.0
        %686 = vmatpush1.msra.mxu0 %v615
        %687 = vmatprep.subr.mxu0 0.0
        %688 = vmatpush1.msra.mxu0 %v616
        %689 = vmatprep.subr.mxu0 0.0
        %690 = vmatpush1.msra.mxu0 0.0
        %691 = vmatprep.subr.mxu0 0.0
        %692 = vmatpush1.msra.mxu0 0.0
        %693 = vmatprep.subr.mxu0 0.0
        %694 = vmatpush1.msra.mxu0 0.0
        %695 = vmatprep.subr.mxu0 0.0
        %696 = vmatpush1.msra.mxu0 0.0
        %697 = vmatprep.subr.mxu0 0.0
        %698 = vmatpush1.msra.mxu0 0.0
        %699 = vmatprep.subr.mxu0 0.0
        %700 = vmatpush1.msra.mxu0 0.0
        %701 = vmatprep.subr.mxu0 0.0
        %702 = vmatpush1.msra.mxu0 0.0
        %703 = vmatprep.subr.mxu0 0.0
        %704 = vmatpush1.msra.mxu0 0.0
        %705 = vmatprep.subr.mxu0 0.0
        %706 = vmatpush1.msra.mxu0 0.0
        %707 = vmatprep.subr.mxu0 0.0
        %708 = vmatpush1.msra.mxu0 0.0
        %709 = vmatprep.subr.mxu0 0.0
        %710 = vmatpush1.msra.mxu0 0.0
        %711 = vmatprep.subr.mxu0 0.0
        %712 = vmatpush1.msra.mxu0 0.0
        %713 = vmatprep.subr.mxu0 0.0
        %714 = vmatpush1.msra.mxu0 0.0
        %715 = vmatprep.subr.mxu0 0.0
        %716 = vmatpush1.msra.mxu0 0.0
        %717 = vmatprep.subr.mxu0 0.0
        %718 = vmatpush1.msra.mxu0 0.0
        %719 = vmatprep.subr.mxu0 0.0
        %720 = vmatpush1.msra.mxu0 0.0
        %721 = vmatprep.subr.mxu0 0.0
        %722 = vmatpush1.msra.mxu0 0.0
        %723 = vmatprep.subr.mxu0 0.0
        %724 = vmatpush1.msra.mxu0 0.0
        %725 = vmatprep.subr.mxu0 0.0
        %726 = vmatpush1.msra.mxu0 0.0
        %727 = vmatprep.subr.mxu0 0.0
        %728 = vmatpush1.msra.mxu0 0.0
        %729 = vmatprep.subr.mxu0 0.0
        %730 = vmatpush1.msra.mxu0 0.0
        %731 = vmatprep.subr.mxu0 0.0
        %732 = vmatpush1.msra.mxu0 0.0
        %733 = vmatprep.subr.mxu0 0.0
        %734 = vmatpush1.msra.mxu0 0.0
        %735 = vmatprep.subr.mxu0 0.0
        %736 = vmatpush1.msra.mxu0 0.0
        %737 = vmatprep.mubr.f32.mxu0 0.0
        %738 = vmatmul.mubr.f32.gmra.mrb[0].mxu0 %v626
        %v739 = vpop.f32.mrb[0].mxu0
        %v740 = vadd.f32 %v622, %v739
        %v741 = vpop.f32.mrb[0].mxu0
        %742 = vmatprep.mubr.f32.mxu0 0.0
        %743 = vmatmul.mubr.f32.gmra.mrb[0].mxu0 %v629
        %v744 = vpop.f32.mrb[0].mxu0
        %v745 = vadd.f32 %v622, %v744
        %v746 = vpop.f32.mrb[0].mxu0
        %747 = vmatprep.mubr.f32.mxu0 0.0
        %748 = vmatmul.mubr.f32.gmra.mrb[0].mxu0 %v632
        %v749 = vpop.f32.mrb[0].mxu0
        %v750 = vadd.f32 %v622, %v749
        %v751 = vpop.f32.mrb[0].mxu0
        %752 = vmatprep.mubr.f32.mxu0 0.0
        %753 = vmatmul.mubr.f32.gmra.mrb[0].mxu0 %v635
        %v754 = vpop.f32.mrb[0].mxu0
        %v755 = vadd.f32 %v622, %v754
        %v756 = vpop.f32.mrb[0].mxu0
        %757 = vmatprep.mubr.f32.mxu0 0.0
        %758 = vmatmul.mubr.f32.gmra.mrb[0].mxu0 %v638
        %v759 = vpop.f32.mrb[0].mxu0
        %v760 = vadd.f32 %v622, %v759
        %v761 = vpop.f32.mrb[0].mxu0
        %762 = vmatprep.mubr.f32.mxu0 0.0
        %763 = vmatmul.mubr.f32.gmra.mrb[0].mxu0 %v641
        %v764 = vpop.f32.mrb[0].mxu0
        %v765 = vadd.f32 %v622, %v764
        %v766 = vpop.f32.mrb[0].mxu0
        %767 = vmatprep.mubr.f32.mxu0 0.0
        %768 = vmatmul.mubr.f32.gmra.mrb[0].mxu0 %v644
        %v769 = vpop.f32.mrb[0].mxu0
        %v770 = vadd.f32 %v622, %v769
        %v771 = vpop.f32.mrb[0].mxu0
        %772 = vmatprep.mubr.f32.mxu0 0.0
        %773 = vmatmul.mubr.f32.gmra.mrb[0].mxu0 %v647
        %v774 = vpop.f32.mrb[0].mxu0
        %v775 = vadd.f32 %v622, %v774
        %v776 = vpop.f32.mrb[0].mxu0
        %777 = vmatprep.mubr.f32.mxu0 0.0
        %778 = vmatmul.mubr.f32.gmra.mrb[0].mxu0 %v650
        %v779 = vpop.f32.mrb[0].mxu0
        %v780 = vadd.f32 %v622, %v779
        %v781 = vpop.f32.mrb[0].mxu0
        %782 = vmatprep.mubr.f32.mxu0 0.0
        %783 = vmatmul.mubr.f32.gmra.mrb[0].mxu0 %v653
        %v784 = vpop.f32.mrb[0].mxu0
        %v785 = vadd.f32 %v622, %v784
        %v786 = vpop.f32.mrb[0].mxu0
        %787 = vmatprep.mubr.f32.mxu0 0.0
        %788 = vmatmul.mubr.f32.gmra.mrb[0].mxu0 %v656
        %v789 = vpop.f32.mrb[0].mxu0
        %v790 = vadd.f32 %v622, %v789
        %v791 = vpop.f32.mrb[0].mxu0
        %792 = vmatprep.mubr.f32.mxu0 0.0
        %793 = vmatmul.mubr.f32.gmra.mrb[0].mxu0 %v659
        %v794 = vpop.f32.mrb[0].mxu0
        %v795 = vadd.f32 %v622, %v794
        %v796 = vpop.f32.mrb[0].mxu0
        %797 = vmatprep.mubr.f32.mxu0 0.0
        %798 = vmatmul.mubr.f32.gmra.mrb[0].mxu0 %v662
        %v799 = vpop.f32.mrb[0].mxu0
        %v800 = vadd.f32 %v622, %v799
        %v801 = vpop.f32.mrb[0].mxu0
        %802 = vmatprep.mubr.f32.mxu0 0.0
        %803 = vmatmul.mubr.f32.gmra.mrb[0].mxu0 %v665
        %v804 = vpop.f32.mrb[0].mxu0
        %v805 = vadd.f32 %v622, %v804
        %v806 = vpop.f32.mrb[0].mxu0
        %807 = vmatprep.mubr.f32.mxu0 0.0
        %808 = vmatmul.mubr.f32.gmra.mrb[0].mxu0 %v668
        %v809 = vpop.f32.mrb[0].mxu0
        %v810 = vadd.f32 %v622, %v809
        %v811 = vpop.f32.mrb[0].mxu0
        %812 = vmatprep.mubr.f32.mxu0 0.0
        %813 = vmatmul.mubr.f32.gmra.mrb[0].mxu0 %v671
        %v814 = vpop.f32.mrb[0].mxu0
        %v815 = vadd.f32 %v622, %v814
        %v816 = vpop.f32.mrb[0].mxu0
        %817 = vdwg.mxu0
        %v818 = vmax.f32 %v740, 0.0
        %v819 = vmax.f32 %v745, 0.0
        %v820 = vmax.f32 %v750, 0.0
        %v821 = vmax.f32 %v755, 0.0
        %v822 = vmax.f32 %v760, 0.0
        %v823 = vmax.f32 %v765, 0.0
        %v824 = vmax.f32 %v770, 0.0
        %v825 = vmax.f32 %v775, 0.0
        %v826 = vmax.f32 %v780, 0.0
        %v827 = vmax.f32 %v785, 0.0
        %v828 = vmax.f32 %v790, 0.0
        %v829 = vmax.f32 %v795, 0.0
        %v830 = vmax.f32 %v800, 0.0
        %v831 = vmax.f32 %v805, 0.0
        %v832 = vmax.f32 %v810, 0.0
        %v833 = vmax.f32 %v815, 0.0
        %v834 = vld [vmem:[%s7] sm:$0xff]
        %v835 = vld [vmem:[%s7 + $0x8] sm:$0xff]
        %v836 = vld [vmem:[%s7 + $0x10] sm:$0xff]
        %v837 = vld [vmem:[%s7 + $0x18] sm:$0xff]
        %v838 = vld [vmem:[%s7 + $0x20] sm:$0xff]
        %v839 = vld [vmem:[%s7 + $0x28] sm:$0xff]
        %v840 = vld [vmem:[%s7 + $0x30] sm:$0xff]
        %v841 = vld [vmem:[%s7 + $0x38] sm:$0xff]
        %v842 = vld [vmem:[%s8] sm:$0x1]
        %v844 = vlaneseq
        %v845 = vshrl.u32 %v844, 7
        %v846 = vsub.s32 0, %v845
        %v847 = vrot.slane %v842, %v846
        %v850 = vsel %vm624, %v818, 0
        %v853 = vsel %vm624, %v819, 0
        %v856 = vsel %vm624, %v820, 0
        %v859 = vsel %vm624, %v821, 0
        %v862 = vsel %vm624, %v822, 0
        %v865 = vsel %vm624, %v823, 0
        %v868 = vsel %vm624, %v824, 0
        %v871 = vsel %vm624, %v825, 0
        %v874 = vsel %vm624, %v826, 0
        %v877 = vsel %vm624, %v827, 0
        %v880 = vsel %vm624, %v828, 0
        %v883 = vsel %vm624, %v829, 0
        %v886 = vsel %vm624, %v830, 0
        %v889 = vsel %vm624, %v831, 0
        %v892 = vsel %vm624, %v832, 0
        %v895 = vsel %vm624, %v833, 0
        %897 = vmatprep.subr.mxu0 0.0
        %898 = vmatpush1.msra.mxu0 %v834
        %899 = vmatprep.subr.mxu0 0.0
        %900 = vmatpush1.msra.mxu0 %v835
        %901 = vmatprep.subr.mxu0 0.0
        %902 = vmatpush1.msra.mxu0 %v836
        %903 = vmatprep.subr.mxu0 0.0
        %904 = vmatpush1.msra.mxu0 %v837
        %905 = vmatprep.subr.mxu0 0.0
        %906 = vmatpush1.msra.mxu0 %v838
        %907 = vmatprep.subr.mxu0 0.0
        %908 = vmatpush1.msra.mxu0 %v839
        %909 = vmatprep.subr.mxu0 0.0
        %910 = vmatpush1.msra.mxu0 %v840
        %911 = vmatprep.subr.mxu0 0.0
        %912 = vmatpush1.msra.mxu0 %v841
        %913 = vmatprep.subr.mxu0 0.0
        %914 = vmatpush1.msra.mxu0 0.0
        %915 = vmatprep.subr.mxu0 0.0
        %916 = vmatpush1.msra.mxu0 0.0
        %917 = vmatprep.subr.mxu0 0.0
        %918 = vmatpush1.msra.mxu0 0.0
        %919 = vmatprep.subr.mxu0 0.0
        %920 = vmatpush1.msra.mxu0 0.0
        %921 = vmatprep.subr.mxu0 0.0
        %922 = vmatpush1.msra.mxu0 0.0
        %923 = vmatprep.subr.mxu0 0.0
        %924 = vmatpush1.msra.mxu0 0.0
        %925 = vmatprep.subr.mxu0 0.0
        %926 = vmatpush1.msra.mxu0 0.0
        %927 = vmatprep.subr.mxu0 0.0
        %928 = vmatpush1.msra.mxu0 0.0
        %929 = vmatprep.subr.mxu0 0.0
        %930 = vmatpush1.msra.mxu0 0.0
        %931 = vmatprep.subr.mxu0 0.0
        %932 = vmatpush1.msra.mxu0 0.0
        %933 = vmatprep.subr.mxu0 0.0
        %934 = vmatpush1.msra.mxu0 0.0
        %935 = vmatprep.subr.mxu0 0.0
        %936 = vmatpush1.msra.mxu0 0.0
        %937 = vmatprep.subr.mxu0 0.0
        %938 = vmatpush1.msra.mxu0 0.0
        %939 = vmatprep.subr.mxu0 0.0
        %940 = vmatpush1.msra.mxu0 0.0
        %941 = vmatprep.subr.mxu0 0.0
        %942 = vmatpush1.msra.mxu0 0.0
        %943 = vmatprep.subr.mxu0 0.0
        %944 = vmatpush1.msra.mxu0 0.0
        %945 = vmatprep.subr.mxu0 0.0
        %946 = vmatpush1.msra.mxu0 0.0
        %947 = vmatprep.subr.mxu0 0.0
        %948 = vmatpush1.msra.mxu0 0.0
        %949 = vmatprep.subr.mxu0 0.0
        %950 = vmatpush1.msra.mxu0 0.0
        %951 = vmatprep.subr.mxu0 0.0
        %952 = vmatpush1.msra.mxu0 0.0
        %953 = vmatprep.subr.mxu0 0.0
        %954 = vmatpush1.msra.mxu0 0.0
        %955 = vmatprep.subr.mxu0 0.0
        %956 = vmatpush1.msra.mxu0 0.0
        %957 = vmatprep.subr.mxu0 0.0
        %958 = vmatpush1.msra.mxu0 0.0
        %959 = vmatprep.subr.mxu0 0.0
        %960 = vmatpush1.msra.mxu0 0.0
        %961 = vmatprep.mubr.f32.mxu0 0.0
        %962 = vmatmul.mubr.f32.gmra.mrb[0].mxu0 %v850
        %v963 = vpop.f32.mrb[0].mxu0
        %v964 = vadd.f32 %v847, %v963
        %v965 = vpop.f32.mrb[0].mxu0
        %966 = vmatprep.mubr.f32.mxu0 0.0
        %967 = vmatmul.mubr.f32.gmra.mrb[0].mxu0 %v853
        %v968 = vpop.f32.mrb[0].mxu0
        %v969 = vadd.f32 %v847, %v968
        %v970 = vpop.f32.mrb[0].mxu0
        %971 = vmatprep.mubr.f32.mxu0 0.0
        %972 = vmatmul.mubr.f32.gmra.mrb[0].mxu0 %v856
        %v973 = vpop.f32.mrb[0].mxu0
        %v974 = vadd.f32 %v847, %v973
        %v975 = vpop.f32.mrb[0].mxu0
        %976 = vmatprep.mubr.f32.mxu0 0.0
        %977 = vmatmul.mubr.f32.gmra.mrb[0].mxu0 %v859
        %v978 = vpop.f32.mrb[0].mxu0
        %v979 = vadd.f32 %v847, %v978
        %v980 = vpop.f32.mrb[0].mxu0
        %981 = vmatprep.mubr.f32.mxu0 0.0
        %982 = vmatmul.mubr.f32.gmra.mrb[0].mxu0 %v862
        %v983 = vpop.f32.mrb[0].mxu0
        %v984 = vadd.f32 %v847, %v983
        %v985 = vpop.f32.mrb[0].mxu0
        %986 = vmatprep.mubr.f32.mxu0 0.0
        %987 = vmatmul.mubr.f32.gmra.mrb[0].mxu0 %v865
        %v988 = vpop.f32.mrb[0].mxu0
        %v989 = vadd.f32 %v847, %v988
        %v990 = vpop.f32.mrb[0].mxu0
        %991 = vmatprep.mubr.f32.mxu0 0.0
        %992 = vmatmul.mubr.f32.gmra.mrb[0].mxu0 %v868
        %v993 = vpop.f32.mrb[0].mxu0
        %v994 = vadd.f32 %v847, %v993
        %v995 = vpop.f32.mrb[0].mxu0
        %996 = vmatprep.mubr.f32.mxu0 0.0
        %997 = vmatmul.mubr.f32.gmra.mrb[0].mxu0 %v871
        %v998 = vpop.f32.mrb[0].mxu0
        %v999 = vadd.f32 %v847, %v998
        %v1000 = vpop.f32.mrb[0].mxu0
        %1001 = vmatprep.mubr.f32.mxu0 0.0
        %1002 = vmatmul.mubr.f32.gmra.mrb[0].mxu0 %v874
        %v1003 = vpop.f32.mrb[0].mxu0
        %v1004 = vadd.f32 %v847, %v1003
        %v1005 = vpop.f32.mrb[0].mxu0
        %1006 = vmatprep.mubr.f32.mxu0 0.0
        %1007 = vmatmul.mubr.f32.gmra.mrb[0].mxu0 %v877
        %v1008 = vpop.f32.mrb[0].mxu0
        %v1009 = vadd.f32 %v847, %v1008
        %v1010 = vpop.f32.mrb[0].mxu0
        %1011 = vmatprep.mubr.f32.mxu0 0.0
        %1012 = vmatmul.mubr.f32.gmra.mrb[0].mxu0 %v880
        %v1013 = vpop.f32.mrb[0].mxu0
        %v1014 = vadd.f32 %v847, %v1013
        %v1015 = vpop.f32.mrb[0].mxu0
        %1016 = vmatprep.mubr.f32.mxu0 0.0
        %1017 = vmatmul.mubr.f32.gmra.mrb[0].mxu0 %v883
        %v1018 = vpop.f32.mrb[0].mxu0
        %v1019 = vadd.f32 %v847, %v1018
        %v1020 = vpop.f32.mrb[0].mxu0
        %1021 = vmatprep.mubr.f32.mxu0 0.0
        %1022 = vmatmul.mubr.f32.gmra.mrb[0].mxu0 %v886
        %v1023 = vpop.f32.mrb[0].mxu0
        %v1024 = vadd.f32 %v847, %v1023
        %v1025 = vpop.f32.mrb[0].mxu0
        %1026 = vmatprep.mubr.f32.mxu0 0.0
        %1027 = vmatmul.mubr.f32.gmra.mrb[0].mxu0 %v889
        %v1028 = vpop.f32.mrb[0].mxu0
        %v1029 = vadd.f32 %v847, %v1028
        %v1030 = vpop.f32.mrb[0].mxu0
        %1031 = vmatprep.mubr.f32.mxu0 0.0
        %1032 = vmatmul.mubr.f32.gmra.mrb[0].mxu0 %v892
        %v1033 = vpop.f32.mrb[0].mxu0
        %v1034 = vadd.f32 %v847, %v1033
        %v1035 = vpop.f32.mrb[0].mxu0
        %1036 = vmatprep.mubr.f32.mxu0 0.0
        %1037 = vmatmul.mubr.f32.gmra.mrb[0].mxu0 %v895
        %v1038 = vpop.f32.mrb[0].mxu0
        %v1039 = vadd.f32 %v847, %v1038
        %v1040 = vpop.f32.mrb[0].mxu0
        %1041 = vdwg.mxu0
        %v1042 = vtanh.pop %v964
        %v1043 = vtanh.pop %v969
        %v1044 = vtanh.pop %v974
        %v1045 = vtanh.pop %v979
        %v1046 = vtanh.pop %v984
        %v1047 = vtanh.pop %v989
        %v1048 = vtanh.pop %v994
        %v1049 = vtanh.pop %v999
        %v1050 = vtanh.pop %v1004
        %v1051 = vtanh.pop %v1009
        %v1052 = vtanh.pop %v1014
        %v1053 = vtanh.pop %v1019
        %v1054 = vtanh.pop %v1024
        %v1055 = vtanh.pop %v1029
        %v1056 = vtanh.pop %v1034
        %v1057 = vtanh.pop %v1039
        %v1058 = vsub.f32 %v372, %v1042
        %v1059 = vsub.f32 %v373, %v1043
        %v1060 = vsub.f32 %v374, %v1044
        %v1061 = vsub.f32 %v375, %v1045
        %v1062 = vsub.f32 %v376, %v1046
        %v1063 = vsub.f32 %v377, %v1047
        %v1064 = vsub.f32 %v378, %v1048
        %v1065 = vsub.f32 %v379, %v1049
        %v1066 = vsub.f32 %v380, %v1050
        %v1067 = vsub.f32 %v381, %v1051
        %v1068 = vsub.f32 %v382, %v1052
        %v1069 = vsub.f32 %v383, %v1053
        %v1070 = vsub.f32 %v384, %v1054
        %v1071 = vsub.f32 %v385, %v1055
        %v1072 = vsub.f32 %v386, %v1056
        %v1073 = vsub.f32 %v387, %v1057
        %v1074 = vmul.f32 %v1058, %v1058
        %v1075 = vmul.f32 %v1059, %v1059
        %v1076 = vmul.f32 %v1060, %v1060
        %v1077 = vmul.f32 %v1061, %v1061
        %v1078 = vmul.f32 %v1062, %v1062
        %v1079 = vmul.f32 %v1063, %v1063
        %v1080 = vmul.f32 %v1064, %v1064
        %v1081 = vmul.f32 %v1065, %v1065
        %v1082 = vmul.f32 %v1066, %v1066
        %v1083 = vmul.f32 %v1067, %v1067
        %v1084 = vmul.f32 %v1068, %v1068
        %v1085 = vmul.f32 %v1069, %v1069
        %v1086 = vmul.f32 %v1070, %v1070
        %v1087 = vmul.f32 %v1071, %v1071
        %v1088 = vmul.f32 %v1072, %v1072
        %v1089 = vmul.f32 %v1073, %v1073
        %v1090 = vld [vmem:[%s2] sm:$0x1]
        %v1092 = vlaneseq
        %v1093 = vshrl.u32 %v1092, 7
        %v1094 = vsub.s32 0, %v1093
        %v1095 = vrot.slane %v1090, %v1094
        %v1097 = vmul.f32 %v1074, %v1095
        %v1098 = vmul.f32 %v1075, %v1095
        %v1099 = vmul.f32 %v1076, %v1095
        %v1100 = vmul.f32 %v1077, %v1095
        %v1101 = vmul.f32 %v1078, %v1095
        %v1102 = vmul.f32 %v1079, %v1095
        %v1103 = vmul.f32 %v1080, %v1095
        %v1104 = vmul.f32 %v1081, %v1095
        %v1105 = vmul.f32 %v1082, %v1095
        %v1106 = vmul.f32 %v1083, %v1095
        %v1107 = vmul.f32 %v1084, %v1095
        %v1108 = vmul.f32 %v1085, %v1095
        %v1109 = vmul.f32 %v1086, %v1095
        %v1110 = vmul.f32 %v1087, %v1095
        %v1111 = vmul.f32 %v1088, %v1095
        %v1112 = vmul.f32 %v1089, %v1095
        %vm1113 = vcmask 31744
        %v1114 = vsel %vm1113, %v1097, 0.0
        %1115 = vadd.xlane.f32.xlu0 %v1114
        %v1116 = vpop.xlane.xlu0 %1115
        %v1117 = vsel %vm1113, %v1098, 0.0
        %1118 = vadd.xlane.f32.xlu0 %v1117
        %v1119 = vpop.xlane.xlu0 %1118
        %v1120 = vsel %vm1113, %v1099, 0.0
        %1121 = vadd.xlane.f32.xlu0 %v1120
        %v1122 = vpop.xlane.xlu0 %1121
        %v1123 = vsel %vm1113, %v1100, 0.0
        %1124 = vadd.xlane.f32.xlu0 %v1123
        %v1125 = vpop.xlane.xlu0 %1124
        %v1126 = vsel %vm1113, %v1101, 0.0
        %1127 = vadd.xlane.f32.xlu0 %v1126
        %v1128 = vpop.xlane.xlu0 %1127
        %v1129 = vsel %vm1113, %v1102, 0.0
        %1130 = vadd.xlane.f32.xlu0 %v1129
        %v1131 = vpop.xlane.xlu0 %1130
        %v1132 = vsel %vm1113, %v1103, 0.0
        %1133 = vadd.xlane.f32.xlu0 %v1132
        %v1134 = vpop.xlane.xlu0 %1133
        %v1135 = vsel %vm1113, %v1104, 0.0
        %1136 = vadd.xlane.f32.xlu0 %v1135
        %v1137 = vpop.xlane.xlu0 %1136
        %v1138 = vsel %vm1113, %v1105, 0.0
        %1139 = vadd.xlane.f32.xlu0 %v1138
        %v1140 = vpop.xlane.xlu0 %1139
        %v1141 = vsel %vm1113, %v1106, 0.0
        %1142 = vadd.xlane.f32.xlu0 %v1141
        %v1143 = vpop.xlane.xlu0 %1142
        %v1144 = vsel %vm1113, %v1107, 0.0
        %1145 = vadd.xlane.f32.xlu0 %v1144
        %v1146 = vpop.xlane.xlu0 %1145
        %v1147 = vsel %vm1113, %v1108, 0.0
        %1148 = vadd.xlane.f32.xlu0 %v1147
        %v1149 = vpop.xlane.xlu0 %1148
        %v1150 = vsel %vm1113, %v1109, 0.0
        %1151 = vadd.xlane.f32.xlu0 %v1150
        %v1152 = vpop.xlane.xlu0 %1151
        %v1153 = vsel %vm1113, %v1110, 0.0
        %1154 = vadd.xlane.f32.xlu0 %v1153
        %v1155 = vpop.xlane.xlu0 %1154
        %v1156 = vsel %vm1113, %v1111, 0.0
        %1157 = vadd.xlane.f32.xlu0 %v1156
        %v1158 = vpop.xlane.xlu0 %1157
        %v1159 = vsel %vm1113, %v1112, 0.0
        %1160 = vadd.xlane.f32.xlu0 %v1159
        %v1161 = vpop.xlane.xlu0 %1160
        %v1162 = vmul.f32 %v1116, -0.5
        %v1163 = vmul.f32 %v1119, -0.5
        %v1164 = vmul.f32 %v1122, -0.5
        %v1165 = vmul.f32 %v1125, -0.5
        %v1166 = vmul.f32 %v1128, -0.5
        %v1167 = vmul.f32 %v1131, -0.5
        %v1168 = vmul.f32 %v1134, -0.5
        %v1169 = vmul.f32 %v1137, -0.5
        %v1170 = vmul.f32 %v1140, -0.5
        %v1171 = vmul.f32 %v1143, -0.5
        %v1172 = vmul.f32 %v1146, -0.5
        %v1173 = vmul.f32 %v1149, -0.5
        %v1174 = vmul.f32 %v1152, -0.5
        %v1175 = vmul.f32 %v1155, -0.5
        %v1176 = vmul.f32 %v1158, -0.5
        %v1177 = vmul.f32 %v1161, -0.5
        %v1178 = vlaneseq
        %v1179 = vand.u32 %v1178, 127
        %vm1180 = vcmp.eq.s32.totalorder %v1179, 0
        %vm1181 = vcmp.eq.s32.totalorder %v1179, 1
        %1183 = vset.pattern.permute.xlu0 4
        %1184 = vperm.xlu0 %1183, %v964
        %v1185 = vpop.permute.xlu0 %1184
        %1188 = vset.pattern.permute.xlu0 4
        %1189 = vperm.xlu0 %1188, %v969
        %v1190 = vpop.permute.xlu0 %1189
        %1193 = vset.pattern.permute.xlu0 4
        %1194 = vperm.xlu0 %1193, %v974
        %v1195 = vpop.permute.xlu0 %1194
        %1198 = vset.pattern.permute.xlu0 4
        %1199 = vperm.xlu0 %1198, %v979
        %v1200 = vpop.permute.xlu0 %1199
        %1203 = vset.pattern.permute.xlu0 4
        %1204 = vperm.xlu0 %1203, %v984
        %v1205 = vpop.permute.xlu0 %1204
        %1208 = vset.pattern.permute.xlu0 4
        %1209 = vperm.xlu0 %1208, %v989
        %v1210 = vpop.permute.xlu0 %1209
        %1213 = vset.pattern.permute.xlu0 4
        %1214 = vperm.xlu0 %1213, %v994
        %v1215 = vpop.permute.xlu0 %1214
        %1218 = vset.pattern.permute.xlu0 4
        %1219 = vperm.xlu0 %1218, %v999
        %v1220 = vpop.permute.xlu0 %1219
        %1223 = vset.pattern.permute.xlu0 4
        %1224 = vperm.xlu0 %1223, %v1004
        %v1225 = vpop.permute.xlu0 %1224
        %1228 = vset.pattern.permute.xlu0 4
        %1229 = vperm.xlu0 %1228, %v1009
        %v1230 = vpop.permute.xlu0 %1229
        %1233 = vset.pattern.permute.xlu0 4
        %1234 = vperm.xlu0 %1233, %v1014
        %v1235 = vpop.permute.xlu0 %1234
        %1238 = vset.pattern.permute.xlu0 4
        %1239 = vperm.xlu0 %1238, %v1019
        %v1240 = vpop.permute.xlu0 %1239
        %1243 = vset.pattern.permute.xlu0 4
        %1244 = vperm.xlu0 %1243, %v1024
        %v1245 = vpop.permute.xlu0 %1244
        %1248 = vset.pattern.permute.xlu0 4
        %1249 = vperm.xlu0 %1248, %v1029
        %v1250 = vpop.permute.xlu0 %1249
        %1253 = vset.pattern.permute.xlu0 4
        %1254 = vperm.xlu0 %1253, %v1034
        %v1255 = vpop.permute.xlu0 %1254
        %1258 = vset.pattern.permute.xlu0 4
        %1259 = vperm.xlu0 %1258, %v1039
        %v1260 = vpop.permute.xlu0 %1259
        %v1262 = vsel %vm1181, %v1185, 0.0
        %v1263 = vsel %vm1181, %v1190, 0.0
        %v1264 = vsel %vm1181, %v1195, 0.0
        %v1265 = vsel %vm1181, %v1200, 0.0
        %v1266 = vsel %vm1181, %v1205, 0.0
        %v1267 = vsel %vm1181, %v1210, 0.0
        %v1268 = vsel %vm1181, %v1215, 0.0
        %v1269 = vsel %vm1181, %v1220, 0.0
        %v1270 = vsel %vm1181, %v1225, 0.0
        %v1271 = vsel %vm1181, %v1230, 0.0
        %v1272 = vsel %vm1181, %v1235, 0.0
        %v1273 = vsel %vm1181, %v1240, 0.0
        %v1274 = vsel %vm1181, %v1245, 0.0
        %v1275 = vsel %vm1181, %v1250, 0.0
        %v1276 = vsel %vm1181, %v1255, 0.0
        %v1277 = vsel %vm1181, %v1260, 0.0
        %v1278 = vsel %vm1180, %v1162, %v1262
        %v1279 = vsel %vm1180, %v1163, %v1263
        %v1280 = vsel %vm1180, %v1164, %v1264
        %v1281 = vsel %vm1180, %v1165, %v1265
        %v1282 = vsel %vm1180, %v1166, %v1266
        %v1283 = vsel %vm1180, %v1167, %v1267
        %v1284 = vsel %vm1180, %v1168, %v1268
        %v1285 = vsel %vm1180, %v1169, %v1269
        %v1286 = vsel %vm1180, %v1170, %v1270
        %v1287 = vsel %vm1180, %v1171, %v1271
        %v1288 = vsel %vm1180, %v1172, %v1272
        %v1289 = vsel %vm1180, %v1173, %v1273
        %v1290 = vsel %vm1180, %v1174, %v1274
        %v1291 = vsel %vm1180, %v1175, %v1275
        %v1292 = vsel %vm1180, %v1176, %v1276
        %v1293 = vsel %vm1180, %v1177, %v1277
        %1294 = vst [vmem:[%s342] sm:$0xff] %v1278
        %1295 = vst [vmem:[%s342 + $0x8] sm:$0xff] %v1279
        %1296 = vst [vmem:[%s342 + $0x10] sm:$0xff] %v1280
        %1297 = vst [vmem:[%s342 + $0x18] sm:$0xff] %v1281
        %1298 = vst [vmem:[%s342 + $0x20] sm:$0xff] %v1282
        %1299 = vst [vmem:[%s342 + $0x28] sm:$0xff] %v1283
        %1300 = vst [vmem:[%s342 + $0x30] sm:$0xff] %v1284
        %1301 = vst [vmem:[%s342 + $0x38] sm:$0xff] %v1285
        %1302 = vst [vmem:[%s342 + $0x40] sm:$0xff] %v1286
        %1303 = vst [vmem:[%s342 + $0x48] sm:$0xff] %v1287
        %1304 = vst [vmem:[%s342 + $0x50] sm:$0xff] %v1288
        %1305 = vst [vmem:[%s342 + $0x58] sm:$0xff] %v1289
        %1306 = vst [vmem:[%s342 + $0x60] sm:$0xff] %v1290
        %1307 = vst [vmem:[%s342 + $0x68] sm:$0xff] %v1291
        %1308 = vst [vmem:[%s342 + $0x70] sm:$0xff] %v1292
        %1309 = vst [vmem:[%s342 + $0x78] sm:$0xff] %v1293
        %s1310 = sand.u32 %s230, 1
        %s1311 = scalar_lea.sflag [#allocation3], %s1310
        %s1312 = sand.u32 %s230, 1
        %s1313 = smul.addr %s1312, 128
        %s1314 = scalar_lea.vmem [#allocation2], %s1313
        // Predicated region
        $region57: #{tpu_custom_call.1} parent=55 // pred_check
          %p1315 = pneg %p240
        $region58: #{tpu_custom_call.1} parent=55 // pred_check_branch
          %1317 = sbr.rel (%p1315) target = $region60
        $region59: #{tpu_custom_call.1} parent=55 // pred_region
          %s1318 = smul.u32 16, %s23
          %s1320 = ssub.s32 2048, 2048
          %1321 = vsyncadd %s1311, %s1320
          %s1322 = smul.addr %s1318, 128
          %s1323 = scalar_lea.hbm %s9, %s1322
          %s1324 = sshll.u32 %s1314, 4
          %s1325 = int_to_ptr.vmem [resolvable:$true] %s1324
          %1330 = dma.vmem_to_hbm [thread:$0]  %s1325, 2048, %s1323, %s1311, 128, 128, 8
        $region60: #{tpu_custom_call.1} parent=55 // pred_fallthru
          _
      $region56: #{tpu_custom_call.1} parent=5 // pred_fallthru
        _
      %p1331 = scmp.le.s32.totalorder 2, %s18
      // Predicated region
      $region61: #{tpu_custom_call.1} parent=5 // pred_check
        %p1332 = pneg %p1331
      $region62: #{tpu_custom_call.1} parent=5 // pred_check_branch
        %1334 = sbr.rel (%p1332) target = $region64
      $region63: #{tpu_custom_call.1} parent=5 // pred_region
        %s1335 = ssub.s32 %s18, 2
        // Predicated region
        $region65: #{tpu_custom_call.1} parent=63 // pred_check
          %p1336 = pneg %p246
        $region66: #{tpu_custom_call.1} parent=63 // pred_check_branch
          %1338 = sbr.rel (%p1336) target = $region68
        $region67: #{tpu_custom_call.1} parent=63 // pred_region
          %s1339 = sand.u32 %s231, 1
          %s1340 = scalar_lea.sflag [#allocation3], %s1339
          %s1341 = sand.u32 %s231, 1
          %s1342 = smul.addr %s1341, 128
          %s1343 = scalar_lea.vmem [#allocation2], %s1342
          %1344 = dma.done %s1340, 2048
        $region68: #{tpu_custom_call.1} parent=63 // pred_fallthru
          _
      $region64: #{tpu_custom_call.1} parent=5 // pred_fallthru
        _
    $region6: #{tpu_custom_call.1} parent=1 // loop_footer
      %s22 = sadd.s32 1, %s18
    $region7: #{tpu_custom_call.1} parent=1 // loop_footer_branch
      %17 = sbr.rel target = $region3
    $region8: #{tpu_custom_call.1} parent=1 // loop_exit
      _
    %1345 = vsyncpa [#allocation3], 1
    %s1346 = scalar_lea.sflag [#allocation3], 1
    %1347 = vsyncpa %s1346, 1

</llo_original>
